<compile_context>
chip_gen: v6e
topology: v6e:2x2x1
jax: 0.10.0
libtpu: 0.0.40
codegen_flags: <defaults>
</compile_context>

<pallas_src>
import functools

import jax
import jax.numpy as jnp
from jax.experimental import pallas as pl
from jax.experimental.pallas import tpu as pltpu

_LANES = 128
_SUBLANES = 8


def _round_up(n, m):
    return ((n + m - 1) // m) * m


def _linear_kernel(x_ref, w_ref, b_ref, o_ref):
    # Plain NN contraction: x (tm, in_n) @ w_t (in_n, tn) -> (tm, tn), f32 accumulate.
    acc = jnp.dot(x_ref[...], w_ref[...], preferred_element_type=jnp.float32)
    o_ref[...] = (acc + b_ref[...]).astype(o_ref.dtype)


def prepare_params(weight, bias, *, compute_dtype=None):
    """One-time parameter prep (outside the per-call path).

    weight: (out_n, in_n) PyTorch Linear layout.
    bias:   (out_n,)
    Returns (w_t, b_row) with w_t: (in_n, out_p), b_row: (1, out_p), out_p a
    multiple of 128 so in-kernel output stores are unmasked, lane-dense vst.
    """
    out_n, in_n = weight.shape
    out_p = _round_up(out_n, _LANES)

    w_t = jnp.transpose(weight)                       # (in_n, out_n), done once
    b = bias
    if out_p != out_n:
        w_t = jnp.pad(w_t, ((0, 0), (0, out_p - out_n)))
        b = jnp.pad(b, (0, out_p - out_n))
    if compute_dtype is not None:
        w_t = w_t.astype(compute_dtype)               # bf16 weight for v6e/v7x MXU
    b_row = b.reshape(1, out_p).astype(jnp.float32)   # bias always added in f32
    return w_t, b_row


@functools.partial(
    jax.jit,
    static_argnames=("out_n", "block_b", "block_n", "compute_dtype", "vmem_limit_bytes"),
)
def latent_classifier_forward(
    x, w_t, b_row, *, out_n, block_b=512, block_n=512, compute_dtype=None,
    vmem_limit_bytes=None,
):
    """Equivalent of torch.nn.Linear(in_n, out_n)(x) with pre-prepared params.

    x:     (B, in_n)     float32
    w_t:   (in_n, out_p) from prepare_params
    b_row: (1, out_p)    from prepare_params
    returns (B, out_n)   float32
    """
    B, in_n = x.shape
    in_n_w, out_p = w_t.shape
    assert in_n == in_n_w, "weight feature dim must match x"
    assert out_p % _LANES == 0 and out_n <= out_p

    out_dtype = x.dtype
    if compute_dtype is not None:
        x = x.astype(compute_dtype)

    # Batch tile: sublane-aligned, capped; last block may be ragged (masked store).
    tm = min(block_b, _round_up(B, _SUBLANES))
    grid_m = pl.cdiv(B, tm)

    # N tile: divides out_p exactly (out_p is a multiple of 128).
    if out_p <= block_n:
        tn = out_p
    elif out_p % block_n == 0:
        tn = block_n
    elif out_p % 256 == 0:
        tn = 256
    else:
        tn = _LANES
    grid_n = out_p // tn

    bytes_accessed = (
        B * in_n * jnp.dtype(x.dtype).itemsize
        + in_n * out_p * jnp.dtype(w_t.dtype).itemsize
        + out_p * jnp.dtype(b_row.dtype).itemsize
        + B * out_p * jnp.dtype(out_dtype).itemsize
    )
    cost = pl.CostEstimate(
        flops=2 * B * in_n * out_n, transcendentals=0, bytes_accessed=bytes_accessed
    )

    cp_kwargs = dict(dimension_semantics=("parallel", "parallel"))
    if vmem_limit_bytes is not None:
        cp_kwargs["vmem_limit_bytes"] = vmem_limit_bytes

    out_padded = pl.pallas_call(
        _linear_kernel,
        out_shape=jax.ShapeDtypeStruct((B, out_p), out_dtype),
        grid=(grid_m, grid_n),
        in_specs=[
            pl.BlockSpec((tm, in_n), lambda i, j: (i, 0)),     # activations: M-tiled
            pl.BlockSpec((in_n, tn), lambda i, j: (0, j)),     # weight: N-tiled, pre-transposed
            pl.BlockSpec((1, tn), lambda i, j: (0, j)),        # bias: N-tiled
        ],
        out_specs=pl.BlockSpec((tm, tn), lambda i, j: (i, j)),
        compiler_params=pltpu.CompilerParams(**cp_kwargs),
        cost_estimate=cost,
    )(x, w_t, b_row)

    # Strip lane padding only if any was added (module semantics: (B, out_n)).
    if out_p != out_n:
        return out_padded[:, :out_n]
    return out_padded


if __name__ == "__main__":
    # Shapes consistent with the module: Linear(in_n=32, out_n=16), batch=8.
    B, in_n, out_n = 8, 32, 16

    key = jax.random.PRNGKey(0)
    kx, kw, kb = jax.random.split(key, 3)

    x = jax.random.normal(kx, (B, in_n), dtype=jnp.float32)
    # Deterministic parameter init (mimics PyTorch Linear's uniform init scale).
    bound = 1.0 / (in_n ** 0.5)
    weight = jax.random.uniform(kw, (out_n, in_n), minval=-bound, maxval=bound,
                                dtype=jnp.float32)
    bias = jax.random.uniform(kb, (out_n,), minval=-bound, maxval=bound,
                              dtype=jnp.float32)

    ref = x @ weight.T + bias

    # One-time param prep (transpose + lane-pad outside the per-call path).
    w_t, b_row = prepare_params(weight, bias)

    out = latent_classifier_forward(x, w_t, b_row, out_n=out_n)
    out = jax.block_until_ready(out)
    assert out.shape == (B, out_n)
    assert jnp.allclose(out, ref, atol=1e-5, rtol=1e-5)

    # Ragged / multi-step batch grid: B=20 with an 8-row tile exercises cdiv grid,
    # the masked partial last block, and the lane-padded-then-sliced output.
    B2 = 20
    x2 = jax.random.normal(jax.random.PRNGKey(1), (B2, in_n), dtype=jnp.float32)
    out2 = jax.block_until_ready(
        latent_classifier_forward(x2, w_t, b_row, out_n=out_n, block_b=8)
    )
    ref2 = x2 @ weight.T + bias
    assert out2.shape == (B2, out_n)
    assert jnp.allclose(out2, ref2, atol=1e-5, rtol=1e-5)

    # bf16 compute path (v6e/v7x 256x256 bf16 MXU): f32 accumulate, looser tolerance.
    w_t_bf, b_row_bf = prepare_params(weight, bias, compute_dtype=jnp.bfloat16)
    out3 = jax.block_until_ready(
        latent_classifier_forward(x, w_t_bf, b_row_bf, out_n=out_n,
                                  compute_dtype=jnp.bfloat16)
    )
    assert out3.shape == (B, out_n)
    assert jnp.allclose(out3, ref, atol=5e-2, rtol=5e-2)

    print("KERNEL_OK")
</pallas_src>

<mosaic_0001>
module attributes {stable_mosaic.version = 11 : i64} {
  func.func @_linear_kernel(%arg0: i32, %arg1: i32, %arg2: memref<8x32xf32, #tpu.memory_space<vmem>>, %arg3: memref<32x128xf32, #tpu.memory_space<vmem>>, %arg4: memref<1x128xf32, #tpu.memory_space<vmem>>, %arg5: memref<8x128xf32, #tpu.memory_space<vmem>>) attributes {dimension_semantics = [#tpu.dimension_semantics<parallel>, #tpu.dimension_semantics<parallel>], iteration_bounds = array<i64: 1, 1>, scalar_prefetch = 0 : i64, scratch_operands = 0 : i64, tpu.core_type = #tpu.core_type<tc>, window_params = [{transform_indices = @transform_0, window_bounds = array<i64: 8, 32>}, {transform_indices = @transform_1, window_bounds = array<i64: 32, 128>}, {transform_indices = @transform_2, window_bounds = array<i64: 1, 128>}, {transform_indices = @transform_3, window_bounds = array<i64: 8, 128>}]} {
    %c0 = arith.constant 0 : index
    %c0_0 = arith.constant 0 : index
    %0 = vector.load %arg2[%c0, %c0_0] : memref<8x32xf32, #tpu.memory_space<vmem>>, vector<8x32xf32>
    %c0_1 = arith.constant 0 : index
    %c0_2 = arith.constant 0 : index
    %1 = vector.load %arg3[%c0_1, %c0_2] : memref<32x128xf32, #tpu.memory_space<vmem>>, vector<32x128xf32>
    %cst = arith.constant dense<0.000000e+00> : vector<8x128xf32>
    %2 = tpu.matmul %0, %1, %cst {dimension_numbers = #tpu.dot_dimension_numbers<[1], [0], [0], [1], [0, 0, 1, 1], [], []>} : vector<8x32xf32>, vector<32x128xf32>, vector<8x128xf32> -> vector<8x128xf32>
    %c0_3 = arith.constant 0 : index
    %c0_4 = arith.constant 0 : index
    %3 = vector.load %arg4[%c0_3, %c0_4] : memref<1x128xf32, #tpu.memory_space<vmem>>, vector<1x128xf32>
    %4 = vector.broadcast %3 : vector<1x128xf32> to vector<8x128xf32>
    %5 = arith.addf %2, %4 : vector<8x128xf32>
    %c0_5 = arith.constant 0 : index
    %c0_6 = arith.constant 0 : index
    %6 = vector.load %arg5[%c0_5, %c0_6] : memref<8x128xf32, #tpu.memory_space<vmem>>, vector<8x128xf32>
    tpu.vector_store %arg5[%c0_5, %c0_6], %5 {strides = array<i32>} : memref<8x128xf32, #tpu.memory_space<vmem>>, vector<8x128xf32>,
    return
  }
  func.func @transform_0(%arg0: i32, %arg1: i32) -> (i32, i32) {
    %c0_i32 = arith.constant 0 : i32
    %c0_i32_0 = arith.constant 0 : i32
    return %arg0, %c0_i32 : i32, i32
  }
  func.func @transform_1(%arg0: i32, %arg1: i32) -> (i32, i32) {
    %c0_i32 = arith.constant 0 : i32
    %c0_i32_0 = arith.constant 0 : i32
    return %c0_i32, %arg1 : i32, i32
  }
  func.func @transform_2(%arg0: i32, %arg1: i32) -> (i32, i32) {
    %c0_i32 = arith.constant 0 : i32
    %c0_i32_0 = arith.constant 0 : i32
    return %c0_i32, %arg1 : i32, i32
  }
  func.func @transform_3(%arg0: i32, %arg1: i32) -> (i32, i32) {
    %c0_i32 = arith.constant 0 : i32
    return %arg0, %arg1 : i32, i32
  }
}

</mosaic_0001>

<llo_original>
// kernel: latent_classifier_forward.1
$region0: #{latent_classifier_forward.1}
  #allocation0 [shape = 'u32[]', space=smem, size = 0x4, offset = 0x4, fixed_abs, tag = 'smem constant byte address 0x4 - core index']
  #allocation1 [shape = 'u32[144,128]{1,0:T(1,128)}', space=vmem, size = 0x12000, scoped, tag = 'internal scratch']
  %s0 = inlined_call_operand.hbm [shape: f32[8,32], index: 0, kind: input, shape index: {}]
  %s1 = inlined_call_operand.hbm [shape: f32[32,128], index: 1, kind: input, shape index: {}]
  %s2 = inlined_call_operand.vmem [shape: f32[1,128], index: 2, kind: input, shape index: {}]
  %s3 = inlined_call_operand.hbm [shape: f32[8,128], index: 3, kind: output, shape index: {}]
  %s4 = sld [smem:[#allocation0]]
  $region30: #{latent_classifier_forward.1} parent=0
    _
  %s6 = ssub.s32 1, %s4
  %s7 = scalar_select 0, %s6, %s4
  $region1: #{latent_classifier_forward.1} parent=0
    #allocation2 [shape = 'u8[4096]{0}', space=vmem, size = 0x1000, scoped, tag = 'input window, operand 0, single buffered']
    #allocation3 [shape = 's32[1]{0}', space=sflag, size = 0x4, scoped, tag = 'scoped memory for latent_classifier_forward.1']
    #allocation4 [shape = 's32[1]{0}', space=sflag, size = 0x4, scoped, tag = 'scoped memory for latent_classifier_forward.1']
    #allocation5 [shape = 'u8[16384]{0}', space=vmem, size = 0x4000, scoped, tag = 'input window, operand 1, single buffered']
    #allocation6 [shape = 's32[1]{0}', space=sflag, size = 0x4, scoped, tag = 'scoped memory for latent_classifier_forward.1']
    #allocation7 [shape = 'u8[4096]{0}', space=vmem, size = 0x1000, scoped, tag = 'output window, operand 0, single buffered']
    %8 = vsyncpa [#allocation3], 0
    %9 = vsyncpa [#allocation6], 0
    %10 = vsyncpa [#allocation4], 0
    // Predicated region
    $region2: #{latent_classifier_forward.1} parent=1 // pred_check
      _
    $region3: #{latent_classifier_forward.1} parent=1 // pred_check_branch
      %12 = sbr.rel (0) target = $region5
    $region4: #{latent_classifier_forward.1} parent=1 // pred_region
      %s14 = ssub.s32 128, 128
      %15 = vsyncadd [#allocation3], %s14
      %s17 = sshll.u32 [#allocation2], 4
      %s18 = int_to_ptr.vmem [resolvable:$true] %s17
      %20 = dma.hbm_to_vmem [thread:$0]  %s0, 128, %s18, [#allocation3]
    $region5: #{latent_classifier_forward.1} parent=1 // pred_fallthru
      _
    // Predicated region
    $region6: #{latent_classifier_forward.1} parent=1 // pred_check
      _
    $region7: #{latent_classifier_forward.1} parent=1 // pred_check_branch
      %22 = sbr.rel (0) target = $region9
    $region8: #{latent_classifier_forward.1} parent=1 // pred_region
      %s24 = ssub.s32 512, 512
      %25 = vsyncadd [#allocation6], %s24
      %s26 = sshll.u32 [#allocation5], 4
      %s27 = int_to_ptr.vmem [resolvable:$true] %s26
      %32 = dma.hbm_to_vmem [thread:$0]  %s1, 512, %s27, [#allocation6], 128, 128, 8
    $region9: #{latent_classifier_forward.1} parent=1 // pred_fallthru
      _
    // Predicated region
    $region10: #{latent_classifier_forward.1} parent=1 // pred_check
      _
    $region11: #{latent_classifier_forward.1} parent=1 // pred_check_branch
      %34 = sbr.rel (0) target = $region13
    $region12: #{latent_classifier_forward.1} parent=1 // pred_region
      _
    $region13: #{latent_classifier_forward.1} parent=1 // pred_fallthru
      _
    // Predicated region
    $region14: #{latent_classifier_forward.1} parent=1 // pred_check
      _
    $region15: #{latent_classifier_forward.1} parent=1 // pred_check_branch
      %36 = sbr.rel (0) target = $region17
    $region16: #{latent_classifier_forward.1} parent=1 // pred_region
      %37 = dma.done [#allocation3], 128
    $region17: #{latent_classifier_forward.1} parent=1 // pred_fallthru
      _
    // Predicated region
    $region18: #{latent_classifier_forward.1} parent=1 // pred_check
      _
    $region19: #{latent_classifier_forward.1} parent=1 // pred_check_branch
      %39 = sbr.rel (0) target = $region21
    $region20: #{latent_classifier_forward.1} parent=1 // pred_region
      %40 = dma.done [#allocation6], 512
    $region21: #{latent_classifier_forward.1} parent=1 // pred_fallthru
      _
    %v41 = vld [vmem:[#allocation2] sm:$0xff]
    %v42 = vld [vmem:[#allocation5] sm:$0xff]
    %v43 = vld [vmem:[#allocation5 + $0x8] sm:$0xff]
    %v44 = vld [vmem:[#allocation5 + $0x10] sm:$0xff]
    %v45 = vld [vmem:[#allocation5 + $0x18] sm:$0xff]
    %v46 = vld [vmem:[%s2] sm:$0x1]
    %v48 = vlaneseq
    %v49 = vshrl.u32 %v48, 7
    %v50 = vsub.s32 0, %v49
    %v51 = vrot.slane %v46, %v50
    %vm53 = vcmask 261120
    %v55 = vsel %vm53, %v41, 0
    %57 = vmatprep.subr.mxu0 0.0
    %58 = vmatpush1.msra.mxu0 0.0
    %59 = vmatprep.subr.mxu0 0.0
    %60 = vmatpush1.msra.mxu0 0.0
    %61 = vmatprep.subr.mxu0 0.0
    %62 = vmatpush1.msra.mxu0 0.0
    %63 = vmatprep.subr.mxu0 0.0
    %64 = vmatpush1.msra.mxu0 0.0
    %65 = vmatprep.subr.mxu0 0.0
    %66 = vmatpush1.msra.mxu0 0.0
    %67 = vmatprep.subr.mxu0 0.0
    %68 = vmatpush1.msra.mxu0 0.0
    %69 = vmatprep.subr.mxu0 0.0
    %70 = vmatpush1.msra.mxu0 0.0
    %71 = vmatprep.subr.mxu0 0.0
    %72 = vmatpush1.msra.mxu0 0.0
    %73 = vmatprep.subr.mxu0 0.0
    %74 = vmatpush1.msra.mxu0 0.0
    %75 = vmatprep.subr.mxu0 0.0
    %76 = vmatpush1.msra.mxu0 0.0
    %77 = vmatprep.subr.mxu0 0.0
    %78 = vmatpush1.msra.mxu0 0.0
    %79 = vmatprep.subr.mxu0 0.0
    %80 = vmatpush1.msra.mxu0 0.0
    %81 = vmatprep.subr.mxu0 0.0
    %82 = vmatpush1.msra.mxu0 %v45
    %83 = vmatprep.subr.mxu0 0.0
    %84 = vmatpush1.msra.mxu0 %v44
    %85 = vmatprep.subr.mxu0 0.0
    %86 = vmatpush1.msra.mxu0 %v43
    %87 = vmatprep.subr.mxu0 0.0
    %88 = vmatpush1.msra.mxu0 %v42
    %89 = vmatprep.subr.mxu0 0.0
    %90 = vmatpush2.msra.mxu0 0.0
    %91 = vmatprep.subr.mxu0 0.0
    %92 = vmatpush2.msra.mxu0 0.0
    %93 = vmatprep.subr.mxu0 0.0
    %94 = vmatpush2.msra.mxu0 0.0
    %95 = vmatprep.subr.mxu0 0.0
    %96 = vmatpush2.msra.mxu0 0.0
    %97 = vmatprep.subr.mxu0 0.0
    %98 = vmatpush2.msra.mxu0 0.0
    %99 = vmatprep.subr.mxu0 0.0
    %100 = vmatpush2.msra.mxu0 0.0
    %101 = vmatprep.subr.mxu0 0.0
    %102 = vmatpush2.msra.mxu0 0.0
    %103 = vmatprep.subr.mxu0 0.0
    %104 = vmatpush2.msra.mxu0 0.0
    %105 = vmatprep.subr.mxu0 0.0
    %106 = vmatpush2.msra.mxu0 0.0
    %107 = vmatprep.subr.mxu0 0.0
    %108 = vmatpush2.msra.mxu0 0.0
    %109 = vmatprep.subr.mxu0 0.0
    %110 = vmatpush2.msra.mxu0 0.0
    %111 = vmatprep.subr.mxu0 0.0
    %112 = vmatpush2.msra.mxu0 0.0
    %113 = vmatprep.subr.mxu0 0.0
    %114 = vmatpush2.msra.mxu0 0.0
    %115 = vmatprep.subr.mxu0 0.0
    %116 = vmatpush2.msra.mxu0 0.0
    %117 = vmatprep.subr.mxu0 0.0
    %118 = vmatpush2.msra.mxu0 0.0
    %119 = vmatprep.subr.mxu0 0.0
    %120 = vmatpush2.msra.mxu0 0.0
    %121 = vmatprep.mubr.f32.mxu0 0.0
    %122 = vmatmul.mubr.f32.gmra.mxu0 %v55
    %v123 = vpop.f32.mrf.mxu0
    %v124 = vadd.f32 %v51, %v123
    %v125 = vpop.f32.mrf.mxu0
    %126 = vdwg.mxu0
    %127 = vst [vmem:[#allocation7] sm:$0xff] %v124
    // Predicated region
    $region22: #{latent_classifier_forward.1} parent=1 // pred_check
      _
    $region23: #{latent_classifier_forward.1} parent=1 // pred_check_branch
      %129 = sbr.rel (0) target = $region25
    $region24: #{latent_classifier_forward.1} parent=1 // pred_region
      %s131 = ssub.s32 128, 128
      %132 = vsyncadd [#allocation4], %s131
      %s134 = sshll.u32 [#allocation7], 4
      %s135 = int_to_ptr.vmem [resolvable:$true] %s134
      %137 = dma.vmem_to_hbm [thread:$0]  %s135, 128, %s3, [#allocation4]
    $region25: #{latent_classifier_forward.1} parent=1 // pred_fallthru
      _
    // Predicated region
    $region26: #{latent_classifier_forward.1} parent=1 // pred_check
      _
    $region27: #{latent_classifier_forward.1} parent=1 // pred_check_branch
      %139 = sbr.rel (0) target = $region29
    $region28: #{latent_classifier_forward.1} parent=1 // pred_region
      %140 = dma.done [#allocation4], 128
    $region29: #{latent_classifier_forward.1} parent=1 // pred_fallthru
      _
    %141 = vsyncpa [#allocation3], 1
    %142 = vsyncpa [#allocation6], 1
    %143 = vsyncpa [#allocation4], 1

</llo_original>
